<compile_context>
chip_gen: v7x
topology: tpu7x:2x2x1
jax: 0.10.0
libtpu: 0.0.40
codegen_flags: <defaults>
</compile_context>

<pallas_src>
import jax
import jax.numpy as jnp
from jax import lax
from jax.experimental import pallas as pl
from jax.experimental.pallas import tpu as pltpu

D_IN, D_H1, D_H2, D_H3, D_OUT = 11, 64, 128, 64, 6
D_OUT_PAD = 8  # fc4 out-features padded 6 -> 8


def _round_up(v, m):
    return ((v + m - 1) // m) * m


def mlp_kernel(x_ref, w1, b1, w2, b2, w3, b3, w4, b4, o_ref):
    # x_ref: (TB, 11) f32 batch-major.  Weights: PyTorch (out, in), bf16.
    # Biases: (out, 1) f32.  Hidden layers are feature-major: batch on lanes.
    x = x_ref[...].astype(jnp.bfloat16)

    # fc1: contract the feature axis of both operands -> (64, TB), f32 accumulate.
    h = lax.dot_general(w1[...], x, (((1,), (1,)), ((), ())),
                        preferred_element_type=jnp.float32)
    h = jnp.maximum(h + b1[...], 0.0).astype(jnp.bfloat16)   # bias/ReLU in f32

    # fc2: (128, 64) @ (64, TB) -> (128, TB)
    h = jnp.dot(w2[...], h, preferred_element_type=jnp.float32)
    h = jnp.maximum(h + b2[...], 0.0).astype(jnp.bfloat16)

    # fc3: (64, 128) @ (128, TB) -> (64, TB)
    h = jnp.dot(w3[...], h, preferred_element_type=jnp.float32)
    h = jnp.maximum(h + b3[...], 0.0).astype(jnp.bfloat16)

    # fc4: (8, 64) @ (64, TB) -> (8, TB); rows 6..7 are zero (padded weights).
    h = jnp.dot(w4[...], h, preferred_element_type=jnp.float32) + b4[...]

    # Small XLU transpose back to batch-major; drop the pad rows; store (TB, 6).
    o_ref[...] = h.T[:, :D_OUT].astype(o_ref.dtype)


def mlp_forward(x, kparams, *, tb=4096):
    """x: (B, 11) float32 -> (B, 6) float32.  kparams from prepare_params()."""
    B = x.shape[0]

    # Tile: multiple of 128 lanes, at most tb, at most the 128-padded batch.
    tb = max(128, _round_up(tb, 128))
    bp128 = _round_up(B, 128)
    TB = min(tb, bp128)
    if bp128 >= 256:  # guarantee >= 2 grid steps so v7x's two TCs both get work
        TB = min(TB, max(128, _round_up(bp128 // 2, 128)))
    Bp = TB * pl.cdiv(B, TB)
    grid = (Bp // TB,)

    if Bp != B:
        x = jnp.pad(x, ((0, Bp - B), (0, 0)))   # only host-side op, only if ragged

    const = lambda a: pl.BlockSpec(a.shape, lambda i: (0, 0))  # VMEM-resident params

    out = pl.pallas_call(
        mlp_kernel,
        out_shape=jax.ShapeDtypeStruct((Bp, D_OUT), jnp.float32),
        grid=grid,
        in_specs=[
            pl.BlockSpec((TB, D_IN), lambda i: (i, 0)),   # x tile, batch-major
            const(kparams["w1"]), const(kparams["b1"]),
            const(kparams["w2"]), const(kparams["b2"]),
            const(kparams["w3"]), const(kparams["b3"]),
            const(kparams["w4"]), const(kparams["b4"]),
        ],
        out_specs=pl.BlockSpec((TB, D_OUT), lambda i: (i, 0)),
        compiler_params=pltpu.CompilerParams(
            dimension_semantics=("parallel",)),            # megacore on v7x
    )(x,
      kparams["w1"], kparams["b1"],
      kparams["w2"], kparams["b2"],
      kparams["w3"], kparams["b3"],
      kparams["w4"], kparams["b4"])

    return out[:B] if Bp != B else out


def init_params(key):
    """Deterministic init matching nn.Linear defaults (f32, PyTorch layout)."""
    dims = [(D_IN, D_H1), (D_H1, D_H2), (D_H2, D_H3), (D_H3, D_OUT)]
    params = {}
    keys = jax.random.split(key, 2 * len(dims))
    for i, (din, dout) in enumerate(dims):
        bound = 1.0 / jnp.sqrt(float(din))
        params[f"w{i + 1}"] = jax.random.uniform(
            keys[2 * i], (dout, din), jnp.float32, -bound, bound)
        params[f"b{i + 1}"] = jax.random.uniform(
            keys[2 * i + 1], (dout,), jnp.float32, -bound, bound)
    return params


def prepare_params(params):
    """f32 PyTorch-layout params -> kernel params (bf16 weights, f32 (out,1)
    biases, fc4 zero-padded from 6 to 8 output rows)."""
    kp = {}
    for i in (1, 2, 3, 4):
        w = params[f"w{i}"]
        b = params[f"b{i}"].reshape(-1, 1).astype(jnp.float32)
        if i == 4:
            w = jnp.pad(w, ((0, D_OUT_PAD - D_OUT), (0, 0)))
            b = jnp.pad(b, ((0, D_OUT_PAD - D_OUT), (0, 0)))
        kp[f"w{i}"] = w.astype(jnp.bfloat16)
        kp[f"b{i}"] = b
    return kp


def reference_forward(x, params):
    """Pure-JAX f32 reference in the original (batch, features) orientation."""
    h = jnp.maximum(x @ params["w1"].T + params["b1"][None, :], 0.0)
    h = jnp.maximum(h @ params["w2"].T + params["b2"][None, :], 0.0)
    h = jnp.maximum(h @ params["w3"].T + params["b3"][None, :], 0.0)
    return h @ params["w4"].T + params["b4"][None, :]


if __name__ == "__main__":
    key = jax.random.PRNGKey(0)
    pkey, xkey, xkey2 = jax.random.split(key, 3)

    params = init_params(pkey)          # f32 reference parameters
    kparams = prepare_params(params)    # bf16-weight kernel parameters

    # Small batch (as used by the original handout agent).
    x = jax.random.normal(xkey, (8, D_IN), dtype=jnp.float32)
    out = jax.block_until_ready(mlp_forward(x, kparams))
    ref = reference_forward(x, params)
    assert out.shape == (8, D_OUT), out.shape
    # Tolerance relaxed vs the f32 reference because matmul operands are bf16
    # (f32 accumulation); observed error is ~1e-2 worst case.
    assert jnp.allclose(out, ref, atol=5e-2, rtol=5e-2), "mismatch vs reference (B=8)"

    # Non-multiple batch with a small tile: exercises the multi-step grid,
    # VMEM-resident weights across steps, batch padding and the row slice.
    x2 = jax.random.normal(xkey2, (300, D_IN), dtype=jnp.float32)
    out2 = jax.block_until_ready(mlp_forward(x2, kparams, tb=256))
    ref2 = reference_forward(x2, params)
    assert out2.shape == (300, D_OUT), out2.shape
    assert jnp.allclose(out2, ref2, atol=5e-2, rtol=5e-2), "mismatch vs reference (B=300)"

    print("KERNEL_OK")
</pallas_src>

<mosaic_0001>
module attributes {stable_mosaic.version = 11 : i64} {
  func.func @mlp_kernel(%arg0: i32, %arg1: memref<128x11xf32, #tpu.memory_space<vmem>>, %arg2: memref<64x11xbf16, #tpu.memory_space<vmem>>, %arg3: memref<64x1xf32, #tpu.memory_space<vmem>>, %arg4: memref<128x64xbf16, #tpu.memory_space<vmem>>, %arg5: memref<128x1xf32, #tpu.memory_space<vmem>>, %arg6: memref<64x128xbf16, #tpu.memory_space<vmem>>, %arg7: memref<64x1xf32, #tpu.memory_space<vmem>>, %arg8: memref<8x64xbf16, #tpu.memory_space<vmem>>, %arg9: memref<8x1xf32, #tpu.memory_space<vmem>>, %arg10: memref<128x6xf32, #tpu.memory_space<vmem>>) attributes {dimension_semantics = [#tpu.dimension_semantics<parallel>], iteration_bounds = array<i64: 1>, scalar_prefetch = 0 : i64, scratch_operands = 0 : i64, tpu.core_type = #tpu.core_type<tc>, window_params = [{transform_indices = @transform_0, window_bounds = array<i64: 128, 11>}, {pipeline_mode = #tpu.pipeline_mode<synchronous>, transform_indices = @transform_1, window_bounds = array<i64: 64, 11>}, {pipeline_mode = #tpu.pipeline_mode<synchronous>, transform_indices = @transform_2, window_bounds = array<i64: 64, 1>}, {pipeline_mode = #tpu.pipeline_mode<synchronous>, transform_indices = @transform_3, window_bounds = array<i64: 128, 64>}, {pipeline_mode = #tpu.pipeline_mode<synchronous>, transform_indices = @transform_4, window_bounds = array<i64: 128, 1>}, {pipeline_mode = #tpu.pipeline_mode<synchronous>, transform_indices = @transform_5, window_bounds = array<i64: 64, 128>}, {pipeline_mode = #tpu.pipeline_mode<synchronous>, transform_indices = @transform_6, window_bounds = array<i64: 64, 1>}, {pipeline_mode = #tpu.pipeline_mode<synchronous>, transform_indices = @transform_7, window_bounds = array<i64: 8, 64>}, {pipeline_mode = #tpu.pipeline_mode<synchronous>, transform_indices = @transform_8, window_bounds = array<i64: 8, 1>}, {transform_indices = @transform_9, window_bounds = array<i64: 128, 6>}]} {
    %c0 = arith.constant 0 : index
    %c0_0 = arith.constant 0 : index
    %0 = vector.load %arg1[%c0, %c0_0] : memref<128x11xf32, #tpu.memory_space<vmem>>, vector<128x11xf32>
    %1 = arith.truncf %0 : vector<128x11xf32> to vector<128x11xbf16>
    %c0_1 = arith.constant 0 : index
    %c0_2 = arith.constant 0 : index
    %2 = vector.load %arg2[%c0_1, %c0_2] : memref<64x11xbf16, #tpu.memory_space<vmem>>, vector<64x11xbf16>
    %cst = arith.constant dense<0.000000e+00> : vector<64x128xf32>
    %3 = tpu.matmul %2, %1, %cst {dimension_numbers = #tpu.dot_dimension_numbers<[1], [1], [0], [0], [0, 0, 1, 0], [], []>} : vector<64x11xbf16>, vector<128x11xbf16>, vector<64x128xf32> -> vector<64x128xf32>
    %c0_3 = arith.constant 0 : index
    %c0_4 = arith.constant 0 : index
    %4 = vector.load %arg3[%c0_3, %c0_4] : memref<64x1xf32, #tpu.memory_space<vmem>>, vector<64x1xf32>
    %5 = vector.broadcast %4 : vector<64x1xf32> to vector<64x128xf32>
    %6 = arith.addf %3, %5 : vector<64x128xf32>
    %cst_5 = arith.constant 0.000000e+00 : f32
    %7 = vector.broadcast %cst_5 : f32 to vector<64x128xf32>
    %8 = arith.maximumf %6, %7 : vector<64x128xf32>
    %9 = arith.truncf %8 : vector<64x128xf32> to vector<64x128xbf16>
    %c0_6 = arith.constant 0 : index
    %c0_7 = arith.constant 0 : index
    %10 = vector.load %arg4[%c0_6, %c0_7] : memref<128x64xbf16, #tpu.memory_space<vmem>>, vector<128x64xbf16>
    %cst_8 = arith.constant dense<0.000000e+00> : vector<128x128xf32>
    %11 = tpu.matmul %10, %9, %cst_8 {dimension_numbers = #tpu.dot_dimension_numbers<[1], [0], [0], [1], [0, 0, 1, 1], [], []>} : vector<128x64xbf16>, vector<64x128xbf16>, vector<128x128xf32> -> vector<128x128xf32>
    %c0_9 = arith.constant 0 : index
    %c0_10 = arith.constant 0 : index
    %12 = vector.load %arg5[%c0_9, %c0_10] : memref<128x1xf32, #tpu.memory_space<vmem>>, vector<128x1xf32>
    %13 = vector.broadcast %12 : vector<128x1xf32> to vector<128x128xf32>
    %14 = arith.addf %11, %13 : vector<128x128xf32>
    %cst_11 = arith.constant 0.000000e+00 : f32
    %15 = vector.broadcast %cst_11 : f32 to vector<128x128xf32>
    %16 = arith.maximumf %14, %15 : vector<128x128xf32>
    %17 = arith.truncf %16 : vector<128x128xf32> to vector<128x128xbf16>
    %c0_12 = arith.constant 0 : index
    %c0_13 = arith.constant 0 : index
    %18 = vector.load %arg6[%c0_12, %c0_13] : memref<64x128xbf16, #tpu.memory_space<vmem>>, vector<64x128xbf16>
    %cst_14 = arith.constant dense<0.000000e+00> : vector<64x128xf32>
    %19 = tpu.matmul %18, %17, %cst_14 {dimension_numbers = #tpu.dot_dimension_numbers<[1], [0], [0], [1], [0, 0, 1, 1], [], []>} : vector<64x128xbf16>, vector<128x128xbf16>, vector<64x128xf32> -> vector<64x128xf32>
    %c0_15 = arith.constant 0 : index
    %c0_16 = arith.constant 0 : index
    %20 = vector.load %arg7[%c0_15, %c0_16] : memref<64x1xf32, #tpu.memory_space<vmem>>, vector<64x1xf32>
    %21 = vector.broadcast %20 : vector<64x1xf32> to vector<64x128xf32>
    %22 = arith.addf %19, %21 : vector<64x128xf32>
    %cst_17 = arith.constant 0.000000e+00 : f32
    %23 = vector.broadcast %cst_17 : f32 to vector<64x128xf32>
    %24 = arith.maximumf %22, %23 : vector<64x128xf32>
    %25 = arith.truncf %24 : vector<64x128xf32> to vector<64x128xbf16>
    %c0_18 = arith.constant 0 : index
    %c0_19 = arith.constant 0 : index
    %26 = vector.load %arg8[%c0_18, %c0_19] : memref<8x64xbf16, #tpu.memory_space<vmem>>, vector<8x64xbf16>
    %cst_20 = arith.constant dense<0.000000e+00> : vector<8x128xf32>
    %27 = tpu.matmul %26, %25, %cst_20 {dimension_numbers = #tpu.dot_dimension_numbers<[1], [0], [0], [1], [0, 0, 1, 1], [], []>} : vector<8x64xbf16>, vector<64x128xbf16>, vector<8x128xf32> -> vector<8x128xf32>
    %c0_21 = arith.constant 0 : index
    %c0_22 = arith.constant 0 : index
    %28 = vector.load %arg9[%c0_21, %c0_22] : memref<8x1xf32, #tpu.memory_space<vmem>>, vector<8x1xf32>
    %29 = vector.broadcast %28 : vector<8x1xf32> to vector<8x128xf32>
    %30 = arith.addf %27, %29 : vector<8x128xf32>
    %31 = tpu.transpose %30, [1, 0] : vector<8x128xf32> -> vector<128x8xf32>
    %32 = vector.extract_strided_slice %31 {offsets = [0, 0], sizes = [128, 6], strides = [1, 1]} : vector<128x8xf32> to vector<128x6xf32>
    %c0_23 = arith.constant 0 : index
    %c0_24 = arith.constant 0 : index
    %33 = vector.load %arg10[%c0_23, %c0_24] : memref<128x6xf32, #tpu.memory_space<vmem>>, vector<128x6xf32>
    tpu.vector_store %arg10[%c0_23, %c0_24], %32 {strides = array<i32>} : memref<128x6xf32, #tpu.memory_space<vmem>>, vector<128x6xf32>,
    return
  }
  func.func @transform_0(%arg0: i32) -> (i32, i32) {
    %c0_i32 = arith.constant 0 : i32
    %c0_i32_0 = arith.constant 0 : i32
    return %arg0, %c0_i32 : i32, i32
  }
  func.func @transform_1(%arg0: i32) -> (i32, i32) {
    %c0_i32 = arith.constant 0 : i32
    %c0_i32_0 = arith.constant 0 : i32
    %c0_i32_1 = arith.constant 0 : i32
    return %c0_i32, %c0_i32_0 : i32, i32
  }
  func.func @transform_2(%arg0: i32) -> (i32, i32) {
    %c0_i32 = arith.constant 0 : i32
    %c0_i32_0 = arith.constant 0 : i32
    %c0_i32_1 = arith.constant 0 : i32
    return %c0_i32, %c0_i32_0 : i32, i32
  }
  func.func @transform_3(%arg0: i32) -> (i32, i32) {
    %c0_i32 = arith.constant 0 : i32
    %c0_i32_0 = arith.constant 0 : i32
    %c0_i32_1 = arith.constant 0 : i32
    return %c0_i32, %c0_i32_0 : i32, i32
  }
  func.func @transform_4(%arg0: i32) -> (i32, i32) {
    %c0_i32 = arith.constant 0 : i32
    %c0_i32_0 = arith.constant 0 : i32
    %c0_i32_1 = arith.constant 0 : i32
    return %c0_i32, %c0_i32_0 : i32, i32
  }
  func.func @transform_5(%arg0: i32) -> (i32, i32) {
    %c0_i32 = arith.constant 0 : i32
    %c0_i32_0 = arith.constant 0 : i32
    %c0_i32_1 = arith.constant 0 : i32
    return %c0_i32, %c0_i32_0 : i32, i32
  }
  func.func @transform_6(%arg0: i32) -> (i32, i32) {
    %c0_i32 = arith.constant 0 : i32
    %c0_i32_0 = arith.constant 0 : i32
    %c0_i32_1 = arith.constant 0 : i32
    return %c0_i32, %c0_i32_0 : i32, i32
  }
  func.func @transform_7(%arg0: i32) -> (i32, i32) {
    %c0_i32 = arith.constant 0 : i32
    %c0_i32_0 = arith.constant 0 : i32
    %c0_i32_1 = arith.constant 0 : i32
    return %c0_i32, %c0_i32_0 : i32, i32
  }
  func.func @transform_8(%arg0: i32) -> (i32, i32) {
    %c0_i32 = arith.constant 0 : i32
    %c0_i32_0 = arith.constant 0 : i32
    %c0_i32_1 = arith.constant 0 : i32
    return %c0_i32, %c0_i32_0 : i32, i32
  }
  func.func @transform_9(%arg0: i32) -> (i32, i32) {
    %c0_i32 = arith.constant 0 : i32
    %c0_i32_0 = arith.constant 0 : i32
    return %arg0, %c0_i32 : i32, i32
  }
}

</mosaic_0001>

<llo_original>
// kernel: tpu_custom_call.1
$region0: #{tpu_custom_call.1}
  #allocation0 [shape = 'u32[]', space=smem, size = 0x4, offset = 0x4, fixed_abs, tag = 'smem constant byte address 0x4 - core index']
  #allocation1 [shape = 'u32[144,128]{1,0:T(1,128)}', space=vmem, size = 0x12000, scoped, tag = 'internal scratch']
  %s0 = inlined_call_operand.vmem [shape: f32[128,11], index: 0, kind: input, shape index: {}]
  %s1 = inlined_call_operand.vmem [shape: bf16[64,11], index: 1, kind: input, shape index: {}]
  %s2 = inlined_call_operand.vmem [shape: f32[64,1], index: 2, kind: input, shape index: {}]
  %s3 = inlined_call_operand.vmem [shape: bf16[128,64], index: 3, kind: input, shape index: {}]
  %s4 = inlined_call_operand.vmem [shape: f32[128,1], index: 4, kind: input, shape index: {}]
  %s5 = inlined_call_operand.vmem [shape: bf16[64,128], index: 5, kind: input, shape index: {}]
  %s6 = inlined_call_operand.vmem [shape: f32[64,1], index: 6, kind: input, shape index: {}]
  %s7 = inlined_call_operand.vmem [shape: bf16[8,64], index: 7, kind: input, shape index: {}]
  %s8 = inlined_call_operand.vmem [shape: f32[8,1], index: 8, kind: input, shape index: {}]
  %s9 = inlined_call_operand.vmem [shape: f32[128,6], index: 9, kind: output, shape index: {}]
  %s10 = sld [smem:[#allocation0]]
  $region46: #{tpu_custom_call.1} parent=0
    _
  %s12 = ssub.s32 1, %s10
  %s13 = scalar_select 0, %s12, %s10
  // Predicated region
  $region2: #{tpu_custom_call.1} parent=0 // pred_check
    _
  $region3: #{tpu_custom_call.1} parent=0 // pred_check_branch
    %15 = sbr.rel (0) target = $region5
  $region4: #{tpu_custom_call.1} parent=0 // pred_region
    _
  $region5: #{tpu_custom_call.1} parent=0 // pred_fallthru
    _
  // Predicated region
  $region6: #{tpu_custom_call.1} parent=0 // pred_check
    _
  $region7: #{tpu_custom_call.1} parent=0 // pred_check_branch
    %17 = sbr.rel (0) target = $region9
  $region8: #{tpu_custom_call.1} parent=0 // pred_region
    _
  $region9: #{tpu_custom_call.1} parent=0 // pred_fallthru
    _
  // Predicated region
  $region10: #{tpu_custom_call.1} parent=0 // pred_check
    _
  $region11: #{tpu_custom_call.1} parent=0 // pred_check_branch
    %19 = sbr.rel (0) target = $region13
  $region12: #{tpu_custom_call.1} parent=0 // pred_region
    _
  $region13: #{tpu_custom_call.1} parent=0 // pred_fallthru
    _
  // Predicated region
  $region14: #{tpu_custom_call.1} parent=0 // pred_check
    _
  $region15: #{tpu_custom_call.1} parent=0 // pred_check_branch
    %21 = sbr.rel (0) target = $region17
  $region16: #{tpu_custom_call.1} parent=0 // pred_region
    _
  $region17: #{tpu_custom_call.1} parent=0 // pred_fallthru
    _
  // Predicated region
  $region18: #{tpu_custom_call.1} parent=0 // pred_check
    _
  $region19: #{tpu_custom_call.1} parent=0 // pred_check_branch
    %23 = sbr.rel (0) target = $region21
  $region20: #{tpu_custom_call.1} parent=0 // pred_region
    _
  $region21: #{tpu_custom_call.1} parent=0 // pred_fallthru
    _
  // Predicated region
  $region22: #{tpu_custom_call.1} parent=0 // pred_check
    _
  $region23: #{tpu_custom_call.1} parent=0 // pred_check_branch
    %25 = sbr.rel (0) target = $region25
  $region24: #{tpu_custom_call.1} parent=0 // pred_region
    _
  $region25: #{tpu_custom_call.1} parent=0 // pred_fallthru
    _
  // Predicated region
  $region26: #{tpu_custom_call.1} parent=0 // pred_check
    _
  $region27: #{tpu_custom_call.1} parent=0 // pred_check_branch
    %27 = sbr.rel (0) target = $region29
  $region28: #{tpu_custom_call.1} parent=0 // pred_region
    _
  $region29: #{tpu_custom_call.1} parent=0 // pred_fallthru
    _
  // Predicated region
  $region30: #{tpu_custom_call.1} parent=0 // pred_check
    _
  $region31: #{tpu_custom_call.1} parent=0 // pred_check_branch
    %29 = sbr.rel (0) target = $region33
  $region32: #{tpu_custom_call.1} parent=0 // pred_region
    _
  $region33: #{tpu_custom_call.1} parent=0 // pred_fallthru
    _
  // Predicated region
  $region34: #{tpu_custom_call.1} parent=0 // pred_check
    _
  $region35: #{tpu_custom_call.1} parent=0 // pred_check_branch
    %31 = sbr.rel (0) target = $region37
  $region36: #{tpu_custom_call.1} parent=0 // pred_region
    _
  $region37: #{tpu_custom_call.1} parent=0 // pred_fallthru
    _
  %v33 = vld [vmem:[%s0] sm:$0xff]
  %v34 = vld [vmem:[%s0 + $0x8] sm:$0xff]
  %v35 = vld [vmem:[%s0 + $0x10] sm:$0xff]
  %v36 = vld [vmem:[%s0 + $0x18] sm:$0xff]
  %v37 = vld [vmem:[%s0 + $0x20] sm:$0xff]
  %v38 = vld [vmem:[%s0 + $0x28] sm:$0xff]
  %v39 = vld [vmem:[%s0 + $0x30] sm:$0xff]
  %v40 = vld [vmem:[%s0 + $0x38] sm:$0xff]
  %v41 = vld [vmem:[%s0 + $0x40] sm:$0xff]
  %v42 = vld [vmem:[%s0 + $0x48] sm:$0xff]
  %v43 = vld [vmem:[%s0 + $0x50] sm:$0xff]
  %v44 = vld [vmem:[%s0 + $0x58] sm:$0xff]
  %v45 = vld [vmem:[%s0 + $0x60] sm:$0xff]
  %v46 = vld [vmem:[%s0 + $0x68] sm:$0xff]
  %v47 = vld [vmem:[%s0 + $0x70] sm:$0xff]
  %v48 = vld [vmem:[%s0 + $0x78] sm:$0xff]
  %v49 = vpack.c.bf16 %v34, %v33
  %v50 = vpack.c.bf16 %v36, %v35
  %v51 = vpack.c.bf16 %v38, %v37
  %v52 = vpack.c.bf16 %v40, %v39
  %v53 = vpack.c.bf16 %v42, %v41
  %v54 = vpack.c.bf16 %v44, %v43
  %v55 = vpack.c.bf16 %v46, %v45
  %v56 = vpack.c.bf16 %v48, %v47
  %v57 = vld [vmem:[%s1] sm:$0xf]
  %v58 = vld [vmem:[%s1 + $0x4] sm:$0xf]
  %v59 = vld [vmem:[%s1 + $0x8] sm:$0xf]
  %v60 = vld [vmem:[%s1 + $0xc] sm:$0xf]
  %v61 = vld [vmem:[%s1 + $0x10] sm:$0xf]
  %v62 = vld [vmem:[%s1 + $0x14] sm:$0xf]
  %v63 = vld [vmem:[%s1 + $0x18] sm:$0xf]
  %v64 = vld [vmem:[%s1 + $0x1c] sm:$0xf]
  %v65 = vld [vmem:[%s2] sm:$0xff]
  %v66 = vld [vmem:[%s2 + $0x8] sm:$0xff]
  %v67 = vld [vmem:[%s2 + $0x10] sm:$0xff]
  %v68 = vld [vmem:[%s2 + $0x18] sm:$0xff]
  %v69 = vld [vmem:[%s2 + $0x20] sm:$0xff]
  %v70 = vld [vmem:[%s2 + $0x28] sm:$0xff]
  %v71 = vld [vmem:[%s2 + $0x30] sm:$0xff]
  %v72 = vld [vmem:[%s2 + $0x38] sm:$0xff]
  %74 = vset.pattern.permute.xlu0 0
  %75 = vperm.xlu0 %74, %v65
  %v76 = vpop.permute.xlu0 %75
  %79 = vset.pattern.permute.xlu0 0
  %80 = vperm.xlu0 %79, %v66
  %v81 = vpop.permute.xlu0 %80
  %84 = vset.pattern.permute.xlu0 0
  %85 = vperm.xlu0 %84, %v67
  %v86 = vpop.permute.xlu0 %85
  %89 = vset.pattern.permute.xlu0 0
  %90 = vperm.xlu0 %89, %v68
  %v91 = vpop.permute.xlu0 %90
  %94 = vset.pattern.permute.xlu0 0
  %95 = vperm.xlu0 %94, %v69
  %v96 = vpop.permute.xlu0 %95
  %99 = vset.pattern.permute.xlu0 0
  %100 = vperm.xlu0 %99, %v70
  %v101 = vpop.permute.xlu0 %100
  %104 = vset.pattern.permute.xlu0 0
  %105 = vperm.xlu0 %104, %v71
  %v106 = vpop.permute.xlu0 %105
  %109 = vset.pattern.permute.xlu0 0
  %110 = vperm.xlu0 %109, %v72
  %v111 = vpop.permute.xlu0 %110
  %v121 = vunpack.c.l.b16 %v57
  %v122 = vunpack.c.l.b16 %v58
  %v123 = vunpack.c.l.b16 %v59
  %v124 = vunpack.c.l.b16 %v60
  %v125 = vunpack.c.l.b16 %v61
  %v126 = vunpack.c.l.b16 %v62
  %v127 = vunpack.c.l.b16 %v63
  %v128 = vunpack.c.l.b16 %v64
  %v129 = vpack.c.b16 %v122, %v121
  %v130 = vpack.c.b16 %v124, %v123
  %v131 = vpack.c.b16 %v126, %v125
  %v132 = vpack.c.b16 %v128, %v127
  %vm133 = vcmask 89088
  %v135 = vsel %vm133, %v129, 0
  %v138 = vsel %vm133, %v130, 0
  %v141 = vsel %vm133, %v131, 0
  %v144 = vsel %vm133, %v132, 0
  %v147 = vsel %vm133, %v49, 0
  %v150 = vsel %vm133, %v50, 0
  %v153 = vsel %vm133, %v51, 0
  %v156 = vsel %vm133, %v52, 0
  %v159 = vsel %vm133, %v53, 0
  %v162 = vsel %vm133, %v54, 0
  %v165 = vsel %vm133, %v55, 0
  %v168 = vsel %vm133, %v56, 0
  %170 = vmatprep.subr.bf16.mxu0 0
  %171 = vmatpush1.bf16.xpose.msra.mxu0 %v147
  %172 = vmatprep.subr.bf16.mxu0 0
  %173 = vmatpush1.bf16.xpose.msra.mxu0 %v150
  %174 = vmatprep.subr.bf16.mxu0 0
  %175 = vmatpush1.bf16.xpose.msra.mxu0 %v153
  %176 = vmatprep.subr.bf16.mxu0 0
  %177 = vmatpush1.bf16.xpose.msra.mxu0 %v156
  %178 = vmatprep.subr.bf16.mxu0 0
  %179 = vmatpush1.bf16.xpose.msra.mxu0 %v159
  %180 = vmatprep.subr.bf16.mxu0 0
  %181 = vmatpush1.bf16.xpose.msra.mxu0 %v162
  %182 = vmatprep.subr.bf16.mxu0 0
  %183 = vmatpush1.bf16.xpose.msra.mxu0 %v165
  %184 = vmatprep.subr.bf16.mxu0 0
  %185 = vmatpush1.bf16.xpose.msra.mxu0 %v168
  %186 = vmatprep.subr.bf16.mxu0 0
  %187 = vmatpush1.bf16.xpose.msra.mxu0 0
  %188 = vmatprep.subr.bf16.mxu0 0
  %189 = vmatpush1.bf16.xpose.msra.mxu0 0
  %190 = vmatprep.subr.bf16.mxu0 0
  %191 = vmatpush1.bf16.xpose.msra.mxu0 0
  %192 = vmatprep.subr.bf16.mxu0 0
  %193 = vmatpush1.bf16.xpose.msra.mxu0 0
  %194 = vmatprep.subr.bf16.mxu0 0
  %195 = vmatpush1.bf16.xpose.msra.mxu0 0
  %196 = vmatprep.subr.bf16.mxu0 0
  %197 = vmatpush1.bf16.xpose.msra.mxu0 0
  %198 = vmatprep.subr.bf16.mxu0 0
  %199 = vmatpush1.bf16.xpose.msra.mxu0 0
  %200 = vmatprep.subr.bf16.mxu0 0
  %201 = vmatpush1.bf16.xpose.msra.mxu0 0
  %202 = vmatprep.mubr.bf16.mxu0 0
  %203 = vmatmul.mubr.bf16.gmra.mrb[0].mxu0 %v135
  %v204 = vpop.f32.mrb[0].mxu0
  %v205 = vadd.f32 %v76, %v204
  %v206 = vpop.f32.mrb[0].mxu0
  %v207 = vpop.f32.mrb[0].mxu0
  %v208 = vadd.f32 %v81, %v207
  %v209 = vpop.f32.mrb[0].mxu0
  %210 = vmatprep.mubr.bf16.mxu0 0
  %211 = vmatmul.mubr.bf16.gmra.mrb[0].mxu0 %v138
  %v212 = vpop.f32.mrb[0].mxu0
  %v213 = vadd.f32 %v86, %v212
  %v214 = vpop.f32.mrb[0].mxu0
  %v215 = vpop.f32.mrb[0].mxu0
  %v216 = vadd.f32 %v91, %v215
  %v217 = vpop.f32.mrb[0].mxu0
  %218 = vmatprep.mubr.bf16.mxu0 0
  %219 = vmatmul.mubr.bf16.gmra.mrb[0].mxu0 %v141
  %v220 = vpop.f32.mrb[0].mxu0
  %v221 = vadd.f32 %v96, %v220
  %v222 = vpop.f32.mrb[0].mxu0
  %v223 = vpop.f32.mrb[0].mxu0
  %v224 = vadd.f32 %v101, %v223
  %v225 = vpop.f32.mrb[0].mxu0
  %226 = vmatprep.mubr.bf16.mxu0 0
  %227 = vmatmul.mubr.bf16.gmra.mrb[0].mxu0 %v144
  %v228 = vpop.f32.mrb[0].mxu0
  %v229 = vadd.f32 %v106, %v228
  %v230 = vpop.f32.mrb[0].mxu0
  %v231 = vpop.f32.mrb[0].mxu0
  %v232 = vadd.f32 %v111, %v231
  %v233 = vpop.f32.mrb[0].mxu0
  %234 = vdwg.mxu0
  %v235 = vmax.f32 %v205, 0.0
  %v236 = vmax.f32 %v208, 0.0
  %v237 = vmax.f32 %v213, 0.0
  %v238 = vmax.f32 %v216, 0.0
  %v239 = vmax.f32 %v221, 0.0
  %v240 = vmax.f32 %v224, 0.0
  %v241 = vmax.f32 %v229, 0.0
  %v242 = vmax.f32 %v232, 0.0
  %v243 = vpack.c.bf16 %v236, %v235
  %v244 = vpack.c.bf16 %v238, %v237
  %v245 = vpack.c.bf16 %v240, %v239
  %v246 = vpack.c.bf16 %v242, %v241
  %v247 = vld [vmem:[%s3] sm:$0xf]
  %v248 = vld [vmem:[%s3 + $0x4] sm:$0xf]
  %v249 = vld [vmem:[%s3 + $0x8] sm:$0xf]
  %v250 = vld [vmem:[%s3 + $0xc] sm:$0xf]
  %v251 = vld [vmem:[%s3 + $0x10] sm:$0xf]
  %v252 = vld [vmem:[%s3 + $0x14] sm:$0xf]
  %v253 = vld [vmem:[%s3 + $0x18] sm:$0xf]
  %v254 = vld [vmem:[%s3 + $0x1c] sm:$0xf]
  %v255 = vld [vmem:[%s3 + $0x20] sm:$0xf]
  %v256 = vld [vmem:[%s3 + $0x24] sm:$0xf]
  %v257 = vld [vmem:[%s3 + $0x28] sm:$0xf]
  %v258 = vld [vmem:[%s3 + $0x2c] sm:$0xf]
  %v259 = vld [vmem:[%s3 + $0x30] sm:$0xf]
  %v260 = vld [vmem:[%s3 + $0x34] sm:$0xf]
  %v261 = vld [vmem:[%s3 + $0x38] sm:$0xf]
  %v262 = vld [vmem:[%s3 + $0x3c] sm:$0xf]
  %v263 = vld [vmem:[%s4] sm:$0xff]
  %v264 = vld [vmem:[%s4 + $0x8] sm:$0xff]
  %v265 = vld [vmem:[%s4 + $0x10] sm:$0xff]
  %v266 = vld [vmem:[%s4 + $0x18] sm:$0xff]
  %v267 = vld [vmem:[%s4 + $0x20] sm:$0xff]
  %v268 = vld [vmem:[%s4 + $0x28] sm:$0xff]
  %v269 = vld [vmem:[%s4 + $0x30] sm:$0xff]
  %v270 = vld [vmem:[%s4 + $0x38] sm:$0xff]
  %v271 = vld [vmem:[%s4 + $0x40] sm:$0xff]
  %v272 = vld [vmem:[%s4 + $0x48] sm:$0xff]
  %v273 = vld [vmem:[%s4 + $0x50] sm:$0xff]
  %v274 = vld [vmem:[%s4 + $0x58] sm:$0xff]
  %v275 = vld [vmem:[%s4 + $0x60] sm:$0xff]
  %v276 = vld [vmem:[%s4 + $0x68] sm:$0xff]
  %v277 = vld [vmem:[%s4 + $0x70] sm:$0xff]
  %v278 = vld [vmem:[%s4 + $0x78] sm:$0xff]
  %280 = vset.pattern.permute.xlu0 0
  %281 = vperm.xlu0 %280, %v263
  %v282 = vpop.permute.xlu0 %281
  %285 = vset.pattern.permute.xlu0 0
  %286 = vperm.xlu0 %285, %v264
  %v287 = vpop.permute.xlu0 %286
  %290 = vset.pattern.permute.xlu0 0
  %291 = vperm.xlu0 %290, %v265
  %v292 = vpop.permute.xlu0 %291
  %295 = vset.pattern.permute.xlu0 0
  %296 = vperm.xlu0 %295, %v266
  %v297 = vpop.permute.xlu0 %296
  %300 = vset.pattern.permute.xlu0 0
  %301 = vperm.xlu0 %300, %v267
  %v302 = vpop.permute.xlu0 %301
  %305 = vset.pattern.permute.xlu0 0
  %306 = vperm.xlu0 %305, %v268
  %v307 = vpop.permute.xlu0 %306
  %310 = vset.pattern.permute.xlu0 0
  %311 = vperm.xlu0 %310, %v269
  %v312 = vpop.permute.xlu0 %311
  %315 = vset.pattern.permute.xlu0 0
  %316 = vperm.xlu0 %315, %v270
  %v317 = vpop.permute.xlu0 %316
  %320 = vset.pattern.permute.xlu0 0
  %321 = vperm.xlu0 %320, %v271
  %v322 = vpop.permute.xlu0 %321
  %325 = vset.pattern.permute.xlu0 0
  %326 = vperm.xlu0 %325, %v272
  %v327 = vpop.permute.xlu0 %326
  %330 = vset.pattern.permute.xlu0 0
  %331 = vperm.xlu0 %330, %v273
  %v332 = vpop.permute.xlu0 %331
  %335 = vset.pattern.permute.xlu0 0
  %336 = vperm.xlu0 %335, %v274
  %v337 = vpop.permute.xlu0 %336
  %340 = vset.pattern.permute.xlu0 0
  %341 = vperm.xlu0 %340, %v275
  %v342 = vpop.permute.xlu0 %341
  %345 = vset.pattern.permute.xlu0 0
  %346 = vperm.xlu0 %345, %v276
  %v347 = vpop.permute.xlu0 %346
  %350 = vset.pattern.permute.xlu0 0
  %351 = vperm.xlu0 %350, %v277
  %v352 = vpop.permute.xlu0 %351
  %355 = vset.pattern.permute.xlu0 0
  %356 = vperm.xlu0 %355, %v278
  %v357 = vpop.permute.xlu0 %356
  %v375 = vunpack.c.l.b16 %v247
  %v376 = vunpack.c.l.b16 %v248
  %v377 = vunpack.c.l.b16 %v249
  %v378 = vunpack.c.l.b16 %v250
  %v379 = vunpack.c.l.b16 %v251
  %v380 = vunpack.c.l.b16 %v252
  %v381 = vunpack.c.l.b16 %v253
  %v382 = vunpack.c.l.b16 %v254
  %v383 = vunpack.c.l.b16 %v255
  %v384 = vunpack.c.l.b16 %v256
  %v385 = vunpack.c.l.b16 %v257
  %v386 = vunpack.c.l.b16 %v258
  %v387 = vunpack.c.l.b16 %v259
  %v388 = vunpack.c.l.b16 %v260
  %v389 = vunpack.c.l.b16 %v261
  %v390 = vunpack.c.l.b16 %v262
  %v391 = vpack.c.b16 %v376, %v375
  %v392 = vpack.c.b16 %v378, %v377
  %v393 = vpack.c.b16 %v380, %v379
  %v394 = vpack.c.b16 %v382, %v381
  %v395 = vpack.c.b16 %v384, %v383
  %v396 = vpack.c.b16 %v386, %v385
  %v397 = vpack.c.b16 %v388, %v387
  %v398 = vpack.c.b16 %v390, %v389
  %vm399 = vcmask 523264
  %v401 = vsel %vm399, %v391, 0
  %v404 = vsel %vm399, %v392, 0
  %v407 = vsel %vm399, %v393, 0
  %v410 = vsel %vm399, %v394, 0
  %v413 = vsel %vm399, %v395, 0
  %v416 = vsel %vm399, %v396, 0
  %v419 = vsel %vm399, %v397, 0
  %v422 = vsel %vm399, %v398, 0
  %424 = vmatprep.subr.bf16.mxu0 0
  %425 = vmatpush1.bf16.msra.mxu0 %v243
  %426 = vmatprep.subr.bf16.mxu0 0
  %427 = vmatpush1.bf16.msra.mxu0 %v244
  %428 = vmatprep.subr.bf16.mxu0 0
  %429 = vmatpush1.bf16.msra.mxu0 %v245
  %430 = vmatprep.subr.bf16.mxu0 0
  %431 = vmatpush1.bf16.msra.mxu0 %v246
  %432 = vmatprep.subr.bf16.mxu0 0
  %433 = vmatpush1.bf16.msra.mxu0 0
  %434 = vmatprep.subr.bf16.mxu0 0
  %435 = vmatpush1.bf16.msra.mxu0 0
  %436 = vmatprep.subr.bf16.mxu0 0
  %437 = vmatpush1.bf16.msra.mxu0 0
  %438 = vmatprep.subr.bf16.mxu0 0
  %439 = vmatpush1.bf16.msra.mxu0 0
  %440 = vmatprep.subr.bf16.mxu0 0
  %441 = vmatpush1.bf16.msra.mxu0 0
  %442 = vmatprep.subr.bf16.mxu0 0
  %443 = vmatpush1.bf16.msra.mxu0 0
  %444 = vmatprep.subr.bf16.mxu0 0
  %445 = vmatpush1.bf16.msra.mxu0 0
  %446 = vmatprep.subr.bf16.mxu0 0
  %447 = vmatpush1.bf16.msra.mxu0 0
  %448 = vmatprep.subr.bf16.mxu0 0
  %449 = vmatpush1.bf16.msra.mxu0 0
  %450 = vmatprep.subr.bf16.mxu0 0
  %451 = vmatpush1.bf16.msra.mxu0 0
  %452 = vmatprep.subr.bf16.mxu0 0
  %453 = vmatpush1.bf16.msra.mxu0 0
  %454 = vmatprep.subr.bf16.mxu0 0
  %455 = vmatpush1.bf16.msra.mxu0 0
  %456 = vmatprep.mubr.bf16.mxu0 0
  %457 = vmatmul.mubr.bf16.gmra.mrb[0].mxu0 %v401
  %v458 = vpop.f32.mrb[0].mxu0
  %v459 = vadd.f32 %v282, %v458
  %v460 = vpop.f32.mrb[0].mxu0
  %v461 = vpop.f32.mrb[0].mxu0
  %v462 = vadd.f32 %v287, %v461
  %v463 = vpop.f32.mrb[0].mxu0
  %464 = vmatprep.mubr.bf16.mxu0 0
  %465 = vmatmul.mubr.bf16.gmra.mrb[0].mxu0 %v404
  %v466 = vpop.f32.mrb[0].mxu0
  %v467 = vadd.f32 %v292, %v466
  %v468 = vpop.f32.mrb[0].mxu0
  %v469 = vpop.f32.mrb[0].mxu0
  %v470 = vadd.f32 %v297, %v469
  %v471 = vpop.f32.mrb[0].mxu0
  %472 = vmatprep.mubr.bf16.mxu0 0
  %473 = vmatmul.mubr.bf16.gmra.mrb[0].mxu0 %v407
  %v474 = vpop.f32.mrb[0].mxu0
  %v475 = vadd.f32 %v302, %v474
  %v476 = vpop.f32.mrb[0].mxu0
  %v477 = vpop.f32.mrb[0].mxu0
  %v478 = vadd.f32 %v307, %v477
  %v479 = vpop.f32.mrb[0].mxu0
  %480 = vmatprep.mubr.bf16.mxu0 0
  %481 = vmatmul.mubr.bf16.gmra.mrb[0].mxu0 %v410
  %v482 = vpop.f32.mrb[0].mxu0
  %v483 = vadd.f32 %v312, %v482
  %v484 = vpop.f32.mrb[0].mxu0
  %v485 = vpop.f32.mrb[0].mxu0
  %v486 = vadd.f32 %v317, %v485
  %v487 = vpop.f32.mrb[0].mxu0
  %488 = vmatprep.mubr.bf16.mxu0 0
  %489 = vmatmul.mubr.bf16.gmra.mrb[0].mxu0 %v413
  %v490 = vpop.f32.mrb[0].mxu0
  %v491 = vadd.f32 %v322, %v490
  %v492 = vpop.f32.mrb[0].mxu0
  %v493 = vpop.f32.mrb[0].mxu0
  %v494 = vadd.f32 %v327, %v493
  %v495 = vpop.f32.mrb[0].mxu0
  %496 = vmatprep.mubr.bf16.mxu0 0
  %497 = vmatmul.mubr.bf16.gmra.mrb[0].mxu0 %v416
  %v498 = vpop.f32.mrb[0].mxu0
  %v499 = vadd.f32 %v332, %v498
  %v500 = vpop.f32.mrb[0].mxu0
  %v501 = vpop.f32.mrb[0].mxu0
  %v502 = vadd.f32 %v337, %v501
  %v503 = vpop.f32.mrb[0].mxu0
  %504 = vmatprep.mubr.bf16.mxu0 0
  %505 = vmatmul.mubr.bf16.gmra.mrb[0].mxu0 %v419
  %v506 = vpop.f32.mrb[0].mxu0
  %v507 = vadd.f32 %v342, %v506
  %v508 = vpop.f32.mrb[0].mxu0
  %v509 = vpop.f32.mrb[0].mxu0
  %v510 = vadd.f32 %v347, %v509
  %v511 = vpop.f32.mrb[0].mxu0
  %512 = vmatprep.mubr.bf16.mxu0 0
  %513 = vmatmul.mubr.bf16.gmra.mrb[0].mxu0 %v422
  %v514 = vpop.f32.mrb[0].mxu0
  %v515 = vadd.f32 %v352, %v514
  %v516 = vpop.f32.mrb[0].mxu0
  %v517 = vpop.f32.mrb[0].mxu0
  %v518 = vadd.f32 %v357, %v517
  %v519 = vpop.f32.mrb[0].mxu0
  %520 = vdwg.mxu0
  %v521 = vmax.f32 %v459, 0.0
  %v522 = vmax.f32 %v462, 0.0
  %v523 = vmax.f32 %v467, 0.0
  %v524 = vmax.f32 %v470, 0.0
  %v525 = vmax.f32 %v475, 0.0
  %v526 = vmax.f32 %v478, 0.0
  %v527 = vmax.f32 %v483, 0.0
  %v528 = vmax.f32 %v486, 0.0
  %v529 = vmax.f32 %v491, 0.0
  %v530 = vmax.f32 %v494, 0.0
  %v531 = vmax.f32 %v499, 0.0
  %v532 = vmax.f32 %v502, 0.0
  %v533 = vmax.f32 %v507, 0.0
  %v534 = vmax.f32 %v510, 0.0
  %v535 = vmax.f32 %v515, 0.0
  %v536 = vmax.f32 %v518, 0.0
  %v537 = vpack.c.bf16 %v522, %v521
  %v538 = vpack.c.bf16 %v524, %v523
  %v539 = vpack.c.bf16 %v526, %v525
  %v540 = vpack.c.bf16 %v528, %v527
  %v541 = vpack.c.bf16 %v530, %v529
  %v542 = vpack.c.bf16 %v532, %v531
  %v543 = vpack.c.bf16 %v534, %v533
  %v544 = vpack.c.bf16 %v536, %v535
  %v545 = vld [vmem:[%s5] sm:$0xf]
  %v546 = vld [vmem:[%s5 + $0x4] sm:$0xf]
  %v547 = vld [vmem:[%s5 + $0x8] sm:$0xf]
  %v548 = vld [vmem:[%s5 + $0xc] sm:$0xf]
  %v549 = vld [vmem:[%s5 + $0x10] sm:$0xf]
  %v550 = vld [vmem:[%s5 + $0x14] sm:$0xf]
  %v551 = vld [vmem:[%s5 + $0x18] sm:$0xf]
  %v552 = vld [vmem:[%s5 + $0x1c] sm:$0xf]
  %v553 = vld [vmem:[%s6] sm:$0xff]
  %v554 = vld [vmem:[%s6 + $0x8] sm:$0xff]
  %v555 = vld [vmem:[%s6 + $0x10] sm:$0xff]
  %v556 = vld [vmem:[%s6 + $0x18] sm:$0xff]
  %v557 = vld [vmem:[%s6 + $0x20] sm:$0xff]
  %v558 = vld [vmem:[%s6 + $0x28] sm:$0xff]
  %v559 = vld [vmem:[%s6 + $0x30] sm:$0xff]
  %v560 = vld [vmem:[%s6 + $0x38] sm:$0xff]
  %562 = vset.pattern.permute.xlu0 0
  %563 = vperm.xlu0 %562, %v553
  %v564 = vpop.permute.xlu0 %563
  %567 = vset.pattern.permute.xlu0 0
  %568 = vperm.xlu0 %567, %v554
  %v569 = vpop.permute.xlu0 %568
  %572 = vset.pattern.permute.xlu0 0
  %573 = vperm.xlu0 %572, %v555
  %v574 = vpop.permute.xlu0 %573
  %577 = vset.pattern.permute.xlu0 0
  %578 = vperm.xlu0 %577, %v556
  %v579 = vpop.permute.xlu0 %578
  %582 = vset.pattern.permute.xlu0 0
  %583 = vperm.xlu0 %582, %v557
  %v584 = vpop.permute.xlu0 %583
  %587 = vset.pattern.permute.xlu0 0
  %588 = vperm.xlu0 %587, %v558
  %v589 = vpop.permute.xlu0 %588
  %592 = vset.pattern.permute.xlu0 0
  %593 = vperm.xlu0 %592, %v559
  %v594 = vpop.permute.xlu0 %593
  %597 = vset.pattern.permute.xlu0 0
  %598 = vperm.xlu0 %597, %v560
  %v599 = vpop.permute.xlu0 %598
  %v609 = vunpack.c.l.b16 %v545
  %v610 = vunpack.c.l.b16 %v546
  %v611 = vunpack.c.l.b16 %v547
  %v612 = vunpack.c.l.b16 %v548
  %v613 = vunpack.c.l.b16 %v549
  %v614 = vunpack.c.l.b16 %v550
  %v615 = vunpack.c.l.b16 %v551
  %v616 = vunpack.c.l.b16 %v552
  %v617 = vpack.c.b16 %v610, %v609
  %v618 = vpack.c.b16 %v612, %v611
  %v619 = vpack.c.b16 %v614, %v613
  %v620 = vpack.c.b16 %v616, %v615
  %625 = vmatprep.subr.bf16.mxu0 0
  %626 = vmatpush1.bf16.msra.mxu0 %v537
  %627 = vmatprep.subr.bf16.mxu0 0
  %628 = vmatpush1.bf16.msra.mxu0 %v538
  %629 = vmatprep.subr.bf16.mxu0 0
  %630 = vmatpush1.bf16.msra.mxu0 %v539
  %631 = vmatprep.subr.bf16.mxu0 0
  %632 = vmatpush1.bf16.msra.mxu0 %v540
  %633 = vmatprep.subr.bf16.mxu0 0
  %634 = vmatpush1.bf16.msra.mxu0 %v541
  %635 = vmatprep.subr.bf16.mxu0 0
  %636 = vmatpush1.bf16.msra.mxu0 %v542
  %637 = vmatprep.subr.bf16.mxu0 0
  %638 = vmatpush1.bf16.msra.mxu0 %v543
  %639 = vmatprep.subr.bf16.mxu0 0
  %640 = vmatpush1.bf16.msra.mxu0 %v544
  %641 = vmatprep.subr.bf16.mxu0 0
  %642 = vmatpush1.bf16.msra.mxu0 0
  %643 = vmatprep.subr.bf16.mxu0 0
  %644 = vmatpush1.bf16.msra.mxu0 0
  %645 = vmatprep.subr.bf16.mxu0 0
  %646 = vmatpush1.bf16.msra.mxu0 0
  %647 = vmatprep.subr.bf16.mxu0 0
  %648 = vmatpush1.bf16.msra.mxu0 0
  %649 = vmatprep.subr.bf16.mxu0 0
  %650 = vmatpush1.bf16.msra.mxu0 0
  %651 = vmatprep.subr.bf16.mxu0 0
  %652 = vmatpush1.bf16.msra.mxu0 0
  %653 = vmatprep.subr.bf16.mxu0 0
  %654 = vmatpush1.bf16.msra.mxu0 0
  %655 = vmatprep.subr.bf16.mxu0 0
  %656 = vmatpush1.bf16.msra.mxu0 0
  %657 = vmatprep.mubr.bf16.mxu0 0
  %658 = vmatmul.mubr.bf16.gmra.mrb[0].mxu0 %v617
  %v659 = vpop.f32.mrb[0].mxu0
  %v660 = vadd.f32 %v564, %v659
  %v661 = vpop.f32.mrb[0].mxu0
  %v662 = vpop.f32.mrb[0].mxu0
  %v663 = vadd.f32 %v569, %v662
  %v664 = vpop.f32.mrb[0].mxu0
  %665 = vmatprep.mubr.bf16.mxu0 0
  %666 = vmatmul.mubr.bf16.gmra.mrb[0].mxu0 %v618
  %v667 = vpop.f32.mrb[0].mxu0
  %v668 = vadd.f32 %v574, %v667
  %v669 = vpop.f32.mrb[0].mxu0
  %v670 = vpop.f32.mrb[0].mxu0
  %v671 = vadd.f32 %v579, %v670
  %v672 = vpop.f32.mrb[0].mxu0
  %673 = vmatprep.mubr.bf16.mxu0 0
  %674 = vmatmul.mubr.bf16.gmra.mrb[0].mxu0 %v619
  %v675 = vpop.f32.mrb[0].mxu0
  %v676 = vadd.f32 %v584, %v675
  %v677 = vpop.f32.mrb[0].mxu0
  %v678 = vpop.f32.mrb[0].mxu0
  %v679 = vadd.f32 %v589, %v678
  %v680 = vpop.f32.mrb[0].mxu0
  %681 = vmatprep.mubr.bf16.mxu0 0
  %682 = vmatmul.mubr.bf16.gmra.mrb[0].mxu0 %v620
  %v683 = vpop.f32.mrb[0].mxu0
  %v684 = vadd.f32 %v594, %v683
  %v685 = vpop.f32.mrb[0].mxu0
  %v686 = vpop.f32.mrb[0].mxu0
  %v687 = vadd.f32 %v599, %v686
  %v688 = vpop.f32.mrb[0].mxu0
  %689 = vdwg.mxu0
  %v690 = vmax.f32 %v660, 0.0
  %v691 = vmax.f32 %v663, 0.0
  %v692 = vmax.f32 %v668, 0.0
  %v693 = vmax.f32 %v671, 0.0
  %v694 = vmax.f32 %v676, 0.0
  %v695 = vmax.f32 %v679, 0.0
  %v696 = vmax.f32 %v684, 0.0
  %v697 = vmax.f32 %v687, 0.0
  %v698 = vpack.c.bf16 %v691, %v690
  %v699 = vpack.c.bf16 %v693, %v692
  %v700 = vpack.c.bf16 %v695, %v694
  %v701 = vpack.c.bf16 %v697, %v696
  %v702 = vld [vmem:[%s7] sm:$0xf]
  %v703 = vld [vmem:[%s8] sm:$0xff]
  %705 = vset.pattern.permute.xlu0 0
  %706 = vperm.xlu0 %705, %v703
  %v707 = vpop.permute.xlu0 %706
  %v710 = vsel %vm399, %v702, 0
  %712 = vmatprep.subr.bf16.mxu0 0
  %713 = vmatpush1.bf16.msra.mxu0 %v698
  %714 = vmatprep.subr.bf16.mxu0 0
  %715 = vmatpush1.bf16.msra.mxu0 %v699
  %716 = vmatprep.subr.bf16.mxu0 0
  %717 = vmatpush1.bf16.msra.mxu0 %v700
  %718 = vmatprep.subr.bf16.mxu0 0
  %719 = vmatpush1.bf16.msra.mxu0 %v701
  %720 = vmatprep.subr.bf16.mxu0 0
  %721 = vmatpush1.bf16.msra.mxu0 0
  %722 = vmatprep.subr.bf16.mxu0 0
  %723 = vmatpush1.bf16.msra.mxu0 0
  %724 = vmatprep.subr.bf16.mxu0 0
  %725 = vmatpush1.bf16.msra.mxu0 0
  %726 = vmatprep.subr.bf16.mxu0 0
  %727 = vmatpush1.bf16.msra.mxu0 0
  %728 = vmatprep.subr.bf16.mxu0 0
  %729 = vmatpush1.bf16.msra.mxu0 0
  %730 = vmatprep.subr.bf16.mxu0 0
  %731 = vmatpush1.bf16.msra.mxu0 0
  %732 = vmatprep.subr.bf16.mxu0 0
  %733 = vmatpush1.bf16.msra.mxu0 0
  %734 = vmatprep.subr.bf16.mxu0 0
  %735 = vmatpush1.bf16.msra.mxu0 0
  %736 = vmatprep.subr.bf16.mxu0 0
  %737 = vmatpush1.bf16.msra.mxu0 0
  %738 = vmatprep.subr.bf16.mxu0 0
  %739 = vmatpush1.bf16.msra.mxu0 0
  %740 = vmatprep.subr.bf16.mxu0 0
  %741 = vmatpush1.bf16.msra.mxu0 0
  %742 = vmatprep.subr.bf16.mxu0 0
  %743 = vmatpush1.bf16.msra.mxu0 0
  %744 = vmatprep.mubr.bf16.mxu0 0
  %745 = vmatmul.mubr.bf16.gmra.mrb[0].mxu0 %v710
  %v746 = vpop.f32.mrb[0].mxu0
  %v747 = vadd.f32 %v707, %v746
  %v748 = vpop.f32.mrb[0].mxu0
  %v749 = vpop.f32.mrb[0].mxu0
  %v750 = vpop.f32.mrb[0].mxu0
  %751 = vdwg.mxu0
  %752 = vxpose.xlu0.b32.start [1/16] %v747, 128
  %753 = vxpose.xlu0.b32.cont [2/16] 0.0, 128
  %754 = vxpose.xlu0.b32.cont [3/16] 0.0, 128
  %755 = vxpose.xlu0.b32.cont [4/16] 0.0, 128
  %756 = vxpose.xlu0.b32.cont [5/16] 0.0, 128
  %757 = vxpose.xlu0.b32.cont [6/16] 0.0, 128
  %758 = vxpose.xlu0.b32.cont [7/16] 0.0, 128
  %759 = vxpose.xlu0.b32.cont [8/16] 0.0, 128
  %760 = vxpose.xlu0.b32.cont [9/16] 0.0, 128
  %761 = vxpose.xlu0.b32.cont [10/16] 0.0, 128
  %762 = vxpose.xlu0.b32.cont [11/16] 0.0, 128
  %763 = vxpose.xlu0.b32.cont [12/16] 0.0, 128
  %764 = vxpose.xlu0.b32.cont [13/16] 0.0, 128
  %765 = vxpose.xlu0.b32.cont [14/16] 0.0, 128
  %766 = vxpose.xlu0.b32.cont [15/16] 0.0, 128
  %767 = vxpose.xlu0.b32.end [16/16] 0.0, 128
  %v768 = vpop.trf.xlu0
  %v769 = vpop.trf.xlu0
  %v770 = vpop.trf.xlu0
  %v771 = vpop.trf.xlu0
  %v772 = vpop.trf.xlu0
  %v773 = vpop.trf.xlu0
  %v774 = vpop.trf.xlu0
  %v775 = vpop.trf.xlu0
  %v776 = vpop.trf.xlu0
  %v777 = vpop.trf.xlu0
  %v778 = vpop.trf.xlu0
  %v779 = vpop.trf.xlu0
  %v780 = vpop.trf.xlu0
  %v781 = vpop.trf.xlu0
  %v782 = vpop.trf.xlu0
  %v783 = vpop.trf.xlu0
  %vm784 = vcmask 48128
  %785 = vst.msk [vmem:[%s9] sm:$0xff] %vm784, %v768
  %786 = vst.msk [vmem:[%s9 + $0x8] sm:$0xff] %vm784, %v769
  %787 = vst.msk [vmem:[%s9 + $0x10] sm:$0xff] %vm784, %v770
  %788 = vst.msk [vmem:[%s9 + $0x18] sm:$0xff] %vm784, %v771
  %789 = vst.msk [vmem:[%s9 + $0x20] sm:$0xff] %vm784, %v772
  %790 = vst.msk [vmem:[%s9 + $0x28] sm:$0xff] %vm784, %v773
  %791 = vst.msk [vmem:[%s9 + $0x30] sm:$0xff] %vm784, %v774
  %792 = vst.msk [vmem:[%s9 + $0x38] sm:$0xff] %vm784, %v775
  %793 = vst.msk [vmem:[%s9 + $0x40] sm:$0xff] %vm784, %v776
  %794 = vst.msk [vmem:[%s9 + $0x48] sm:$0xff] %vm784, %v777
  %795 = vst.msk [vmem:[%s9 + $0x50] sm:$0xff] %vm784, %v778
  %796 = vst.msk [vmem:[%s9 + $0x58] sm:$0xff] %vm784, %v779
  %797 = vst.msk [vmem:[%s9 + $0x60] sm:$0xff] %vm784, %v780
  %798 = vst.msk [vmem:[%s9 + $0x68] sm:$0xff] %vm784, %v781
  %799 = vst.msk [vmem:[%s9 + $0x70] sm:$0xff] %vm784, %v782
  %800 = vst.msk [vmem:[%s9 + $0x78] sm:$0xff] %vm784, %v783
  // Predicated region
  $region38: #{tpu_custom_call.1} parent=0 // pred_check
    _
  $region39: #{tpu_custom_call.1} parent=0 // pred_check_branch
    %802 = sbr.rel (0) target = $region41
  $region40: #{tpu_custom_call.1} parent=0 // pred_region
    _
  $region41: #{tpu_custom_call.1} parent=0 // pred_fallthru
    _
  // Predicated region
  $region42: #{tpu_custom_call.1} parent=0 // pred_check
    _
  $region43: #{tpu_custom_call.1} parent=0 // pred_check_branch
    %804 = sbr.rel (0) target = $region45
  $region44: #{tpu_custom_call.1} parent=0 // pred_region
    _
  $region45: #{tpu_custom_call.1} parent=0 // pred_fallthru
    _

</llo_original>
